<compile_context>
chip_gen: v6e
topology: v6e:2x2x1
jax: 0.10.0
libtpu: 0.0.40
codegen_flags: <defaults>
</compile_context>

<pallas_src>
import functools

import jax
import jax.numpy as jnp
from jax.experimental import pallas as pl
from jax.experimental.pallas import tpu as pltpu

LANES = 128
TARGET_BLOCK_BYTES = 2 * 1024 * 1024   # per-input, per-step HBM block
VMEM_LIMIT_BYTES = 32 * 1024 * 1024


def _sublane_granule(dtype) -> int:
    """Sublane packing granule for a dtype: 8 (4B), 16 (2B), 32 (1B)."""
    itemsize = jnp.dtype(dtype).itemsize
    return max(8, 32 // itemsize)


@functools.lru_cache(maxsize=1)
def _num_tensorcores() -> int:
    """2 on v7x (dual TensorCore per chip), 1 on v5e/v6e/unknown."""
    try:
        kind = str(getattr(jax.devices()[0], "device_kind", "")).lower()
        if "v7" in kind or "7x" in kind:
            return 2
    except Exception:
        pass
    return 1


def _make_sse_kernel(tile_rows: int):
    folds = tile_rows // 8  # tile_rows is always a multiple of 8

    def kernel(p_ref, t_ref, o_ref):
        j = pl.program_id(1)  # reduction step within this split

        @pl.when(j == 0)
        def _():
            o_ref[...] = jnp.zeros_like(o_ref)

        d = p_ref[...].astype(jnp.float32) - t_ref[...].astype(jnp.float32)
        sq = d * d
        # Tile-aligned (free) reshape; reduce to a full (8,128) vreg block with
        # plain VALU adds, then one unmasked full-block accumulate.
        o_ref[...] += jnp.sum(sq.reshape(folds, 8, LANES), axis=0)

    return kernel


def sse_loss(y_pred, y_true):
    """Sum of squared errors: sum((y_pred - y_true)**2) -> scalar f32."""
    assert y_pred.shape == y_true.shape, "shapes must match"

    p = y_pred.reshape(-1)
    t = y_true.reshape(-1)
    n = p.shape[0]
    if n == 0:
        return jnp.float32(0.0)

    rows_total = n // LANES
    granule = max(_sublane_granule(p.dtype), _sublane_granule(t.dtype))
    max_item = max(jnp.dtype(p.dtype).itemsize, jnp.dtype(t.dtype).itemsize)
    target_rows = max(
        granule, (TARGET_BLOCK_BYTES // (LANES * max_item)) // granule * granule
    )

    # ---- choose an exact-coverage tiling (no in-kernel masking needed) ----
    splits = 1
    num_tiles = 0
    tile_rows = 0
    if rows_total >= granule:
        num_tiles = max(1, rows_total // target_rows)
        if _num_tensorcores() >= 2 and num_tiles >= 2:
            splits = 2
            num_tiles -= num_tiles % 2  # even tile count -> exact per-core split
        tile_rows = (rows_total // num_tiles) // granule * granule
        tile_rows = min(tile_rows, 2 * target_rows)  # VMEM guard (rarely binds)

    kernel_rows = num_tiles * tile_rows
    main = kernel_rows * LANES

    # Ragged remainder (< one tile of rows, plus the <128-element tail) is a
    # tiny fraction of the data; plain JAX handles it at roofline.
    rem_sse = None
    if main < n:
        dr = p[main:].astype(jnp.float32) - t[main:].astype(jnp.float32)
        rem_sse = jnp.sum(dr * dr)

    if kernel_rows == 0:
        return rem_sse if rem_sse is not None else jnp.float32(0.0)

    p2 = p[:main].reshape(kernel_rows, LANES)
    t2 = t[:main].reshape(kernel_rows, LANES)

    tiles_per_split = num_tiles // splits

    def in_map(c, j):
        return (c * tiles_per_split + j, 0)

    def out_map(c, j):
        return (c, 0)

    if splits == 2:
        dims = (pltpu.CORE_PARALLEL, pltpu.ARBITRARY)  # real dual-TC sharding on v7x
    else:
        dims = (pltpu.ARBITRARY, pltpu.ARBITRARY)

    in_bytes = kernel_rows * LANES * (
        jnp.dtype(p.dtype).itemsize + jnp.dtype(t.dtype).itemsize
    )
    cost = pl.CostEstimate(
        flops=3 * kernel_rows * LANES,
        transcendentals=0,
        bytes_accessed=in_bytes + splits * 8 * LANES * 4,
    )

    partials = pl.pallas_call(
        _make_sse_kernel(tile_rows),
        out_shape=jax.ShapeDtypeStruct((splits * 8, LANES), jnp.float32),
        grid_spec=pltpu.PrefetchScalarGridSpec(
            num_scalar_prefetch=0,
            grid=(splits, tiles_per_split),
            in_specs=[
                pl.BlockSpec((tile_rows, LANES), in_map),
                pl.BlockSpec((tile_rows, LANES), in_map),
            ],
            out_specs=pl.BlockSpec((8, LANES), out_map),
        ),
        compiler_params=pltpu.CompilerParams(
            dimension_semantics=dims,
            vmem_limit_bytes=VMEM_LIMIT_BYTES,
        ),
        cost_estimate=cost,
    )(p2, t2)

    total = jnp.sum(partials)
    if rem_sse is not None:
        total = total + rem_sse
    return total


if __name__ == "__main__":
    key = jax.random.PRNGKey(0)
    k1, k2 = jax.random.split(key)

    # Small NCHW-like shape consistent with a typical pose-model output.
    shape = (2, 4, 16, 16)
    y_pred = jax.random.normal(k1, shape, dtype=jnp.float32)
    y_true = jax.random.normal(k2, shape, dtype=jnp.float32)

    loss = sse_loss(y_pred, y_true)
    jax.block_until_ready(loss)

    # Cross-check against plain JAX reference.
    ref = jnp.sum((y_pred - y_true) ** 2)
    assert jnp.allclose(loss, ref, rtol=1e-5, atol=1e-5), (loss, ref)

    print("KERNEL_OK")
</pallas_src>

<mosaic_0001>
module attributes {stable_mosaic.version = 11 : i64} {
  func.func @kernel(%arg0: i32, %arg1: i32, %arg2: memref<16x128xf32, #tpu.memory_space<vmem>>, %arg3: memref<16x128xf32, #tpu.memory_space<vmem>>, %arg4: memref<8x128xf32, #tpu.memory_space<vmem>>) attributes {dimension_semantics = [#tpu.dimension_semantics<arbitrary>, #tpu.dimension_semantics<arbitrary>], iteration_bounds = array<i64: 1, 1>, scalar_prefetch = 0 : i64, scratch_operands = 0 : i64, tpu.core_type = #tpu.core_type<tc>, window_params = [{transform_indices = @transform_0, window_bounds = array<i64: 16, 128>}, {transform_indices = @transform_1, window_bounds = array<i64: 16, 128>}, {transform_indices = @transform_2, window_bounds = array<i64: 8, 128>}]} {
    %c0_i32 = arith.constant 0 : i32
    %0 = arith.cmpi eq, %arg1, %c0_i32 : i32
    %1 = arith.extui %0 : i1 to i32
    %c0_i32_0 = arith.constant 0 : i32
    %2 = arith.cmpi ne, %1, %c0_i32_0 : i32
    scf.if %2 {
      %cst_8 = arith.constant 0.000000e+00 : f32
      %12 = vector.broadcast %cst_8 : f32 to vector<8x128xf32>
      %c0_9 = arith.constant 0 : index
      %c0_10 = arith.constant 0 : index
      %13 = vector.load %arg4[%c0_9, %c0_10] : memref<8x128xf32, #tpu.memory_space<vmem>>, vector<8x128xf32>
      tpu.vector_store %arg4[%c0_9, %c0_10], %12 {strides = array<i32>} : memref<8x128xf32, #tpu.memory_space<vmem>>, vector<8x128xf32>,
    } else {
    }
    %c0 = arith.constant 0 : index
    %c0_1 = arith.constant 0 : index
    %3 = vector.load %arg2[%c0, %c0_1] : memref<16x128xf32, #tpu.memory_space<vmem>>, vector<16x128xf32>
    %c0_2 = arith.constant 0 : index
    %c0_3 = arith.constant 0 : index
    %4 = vector.load %arg3[%c0_2, %c0_3] : memref<16x128xf32, #tpu.memory_space<vmem>>, vector<16x128xf32>
    %5 = arith.subf %3, %4 : vector<16x128xf32>
    %6 = arith.mulf %5, %5 : vector<16x128xf32>
    %c0_4 = arith.constant 0 : index
    %c0_5 = arith.constant 0 : index
    %7 = vector.load %arg4[%c0_4, %c0_5] : memref<8x128xf32, #tpu.memory_space<vmem>>, vector<8x128xf32>
    %8 = vector.shape_cast %6 : vector<16x128xf32> to vector<2x8x128xf32>
    %cst = arith.constant dense<0.000000e+00> : vector<8x128xf32>
    %9 = vector.multi_reduction <add>, %8, %cst [0] : vector<2x8x128xf32> to vector<8x128xf32>
    %10 = arith.addf %7, %9 : vector<8x128xf32>
    %c0_6 = arith.constant 0 : index
    %c0_7 = arith.constant 0 : index
    %11 = vector.load %arg4[%c0_6, %c0_7] : memref<8x128xf32, #tpu.memory_space<vmem>>, vector<8x128xf32>
    tpu.vector_store %arg4[%c0_6, %c0_7], %10 {strides = array<i32>} : memref<8x128xf32, #tpu.memory_space<vmem>>, vector<8x128xf32>,
    return
  }
  func.func @transform_0(%arg0: i32, %arg1: i32) -> (i32, i32) {
    %c1_i32 = arith.constant 1 : i32
    %0 = arith.muli %arg0, %c1_i32 : i32
    %1 = arith.addi %0, %arg1 : i32
    %c0_i32 = arith.constant 0 : i32
    %c0_i32_0 = arith.constant 0 : i32
    return %1, %c0_i32 : i32, i32
  }
  func.func @transform_1(%arg0: i32, %arg1: i32) -> (i32, i32) {
    %c1_i32 = arith.constant 1 : i32
    %0 = arith.muli %arg0, %c1_i32 : i32
    %1 = arith.addi %0, %arg1 : i32
    %c0_i32 = arith.constant 0 : i32
    %c0_i32_0 = arith.constant 0 : i32
    return %1, %c0_i32 : i32, i32
  }
  func.func @transform_2(%arg0: i32, %arg1: i32) -> (i32, i32) {
    %c0_i32 = arith.constant 0 : i32
    %c0_i32_0 = arith.constant 0 : i32
    return %arg0, %c0_i32 : i32, i32
  }
}

</mosaic_0001>

<llo_original>
// kernel: tpu_custom_call.1
$region0: #{tpu_custom_call.1}
  #allocation0 [shape = 'u32[]', space=smem, size = 0x4, offset = 0x4, fixed_abs, tag = 'smem constant byte address 0x4 - core index']
  #allocation1 [shape = 'u32[144,128]{1,0:T(1,128)}', space=vmem, size = 0x12000, scoped, tag = 'internal scratch']
  %s0 = inlined_call_operand.hbm [shape: f32[16,128], index: 0, kind: input, shape index: {}]
  %s1 = inlined_call_operand.hbm [shape: f32[16,128], index: 1, kind: input, shape index: {}]
  %s2 = inlined_call_operand.hbm [shape: f32[8,128], index: 2, kind: output, shape index: {}]
  %s3 = sld [smem:[#allocation0]]
  $region30: #{tpu_custom_call.1} parent=0
    _
  %s5 = ssub.s32 1, %s3
  %s6 = scalar_select 0, %s5, %s3
  $region1: #{tpu_custom_call.1} parent=0
    #allocation2 [shape = 'u8[8192]{0}', space=vmem, size = 0x2000, scoped, tag = 'input window, operand 0, single buffered']
    #allocation3 [shape = 's32[1]{0}', space=sflag, size = 0x4, scoped, tag = 'scoped memory for tpu_custom_call.1']
    #allocation4 [shape = 's32[1]{0}', space=sflag, size = 0x4, scoped, tag = 'scoped memory for tpu_custom_call.1']
    #allocation5 [shape = 'u8[8192]{0}', space=vmem, size = 0x2000, scoped, tag = 'input window, operand 1, single buffered']
    #allocation6 [shape = 's32[1]{0}', space=sflag, size = 0x4, scoped, tag = 'scoped memory for tpu_custom_call.1']
    #allocation7 [shape = 'u8[4096]{0}', space=vmem, size = 0x1000, scoped, tag = 'output window, operand 0, single buffered']
    %7 = vsyncpa [#allocation3], 0
    %8 = vsyncpa [#allocation6], 0
    %9 = vsyncpa [#allocation4], 0
    // Predicated region
    $region2: #{tpu_custom_call.1} parent=1 // pred_check
      _
    $region3: #{tpu_custom_call.1} parent=1 // pred_check_branch
      %11 = sbr.rel (0) target = $region5
    $region4: #{tpu_custom_call.1} parent=1 // pred_region
      %s12 = sadd.s32 0, 0
      %s13 = smul.u32 2, %s12
      %s15 = ssub.s32 256, 256
      %16 = vsyncadd [#allocation3], %s15
      %s17 = smul.addr %s13, 128
      %s18 = scalar_lea.hbm %s0, %s17
      %s19 = sshll.u32 [#allocation2], 4
      %s20 = int_to_ptr.vmem [resolvable:$true] %s19
      %25 = dma.hbm_to_vmem [thread:$0]  %s18, 256, %s20, [#allocation3], 128, 128, 8
    $region5: #{tpu_custom_call.1} parent=1 // pred_fallthru
      _
    // Predicated region
    $region6: #{tpu_custom_call.1} parent=1 // pred_check
      _
    $region7: #{tpu_custom_call.1} parent=1 // pred_check_branch
      %27 = sbr.rel (0) target = $region9
    $region8: #{tpu_custom_call.1} parent=1 // pred_region
      %s28 = sadd.s32 0, 0
      %s29 = smul.u32 2, %s28
      %s31 = ssub.s32 256, 256
      %32 = vsyncadd [#allocation6], %s31
      %s33 = smul.addr %s29, 128
      %s34 = scalar_lea.hbm %s1, %s33
      %s35 = sshll.u32 [#allocation5], 4
      %s36 = int_to_ptr.vmem [resolvable:$true] %s35
      %41 = dma.hbm_to_vmem [thread:$0]  %s34, 256, %s36, [#allocation6], 128, 128, 8
    $region9: #{tpu_custom_call.1} parent=1 // pred_fallthru
      _
    // Predicated region
    $region10: #{tpu_custom_call.1} parent=1 // pred_check
      _
    $region11: #{tpu_custom_call.1} parent=1 // pred_check_branch
      %43 = sbr.rel (0) target = $region13
    $region12: #{tpu_custom_call.1} parent=1 // pred_region
      %44 = dma.done [#allocation3], 256
    $region13: #{tpu_custom_call.1} parent=1 // pred_fallthru
      _
    // Predicated region
    $region14: #{tpu_custom_call.1} parent=1 // pred_check
      _
    $region15: #{tpu_custom_call.1} parent=1 // pred_check_branch
      %46 = sbr.rel (0) target = $region17
    $region16: #{tpu_custom_call.1} parent=1 // pred_region
      %47 = dma.done [#allocation6], 256
    $region17: #{tpu_custom_call.1} parent=1 // pred_fallthru
      _
    %s48 = sadd.s32 0, 0
    %s49 = smul.u32 2, %s48
    %s50 = sadd.s32 0, 0
    %s51 = smul.u32 2, %s50
    %p52 = scmp.eq.s32.totalorder 0, 0
    // Predicated region
    $region18: #{tpu_custom_call.1} parent=1 // pred_check
      %p53 = pneg %p52
    $region19: #{tpu_custom_call.1} parent=1 // pred_check_branch
      %55 = sbr.rel (%p53) target = $region21
    $region20: #{tpu_custom_call.1} parent=1 // pred_region
      %56 = vst [vmem:[#allocation7] sm:$0xff] 0.0
    $region21: #{tpu_custom_call.1} parent=1 // pred_fallthru
      _
    %v57 = vld [vmem:[#allocation2] sm:$0xff]
    %v58 = vld [vmem:[#allocation2 + $0x8] sm:$0xff]
    %v59 = vld [vmem:[#allocation5] sm:$0xff]
    %v60 = vld [vmem:[#allocation5 + $0x8] sm:$0xff]
    %v61 = vsub.f32 %v57, %v59
    %v62 = vsub.f32 %v58, %v60
    %v63 = vmul.f32 %v61, %v61
    %v64 = vmul.f32 %v62, %v62
    %v65 = vld [vmem:[#allocation7] sm:$0xff]
    %v66 = vadd.f32 %v63, %v64
    %v67 = vadd.f32 %v65, %v66
    %68 = vst [vmem:[#allocation7] sm:$0xff] %v67
    // Predicated region
    $region22: #{tpu_custom_call.1} parent=1 // pred_check
      _
    $region23: #{tpu_custom_call.1} parent=1 // pred_check_branch
      %70 = sbr.rel (0) target = $region25
    $region24: #{tpu_custom_call.1} parent=1 // pred_region
      %s72 = ssub.s32 128, 128
      %73 = vsyncadd [#allocation4], %s72
      %s75 = sshll.u32 [#allocation7], 4
      %s76 = int_to_ptr.vmem [resolvable:$true] %s75
      %78 = dma.vmem_to_hbm [thread:$0]  %s76, 128, %s2, [#allocation4]
    $region25: #{tpu_custom_call.1} parent=1 // pred_fallthru
      _
    // Predicated region
    $region26: #{tpu_custom_call.1} parent=1 // pred_check
      _
    $region27: #{tpu_custom_call.1} parent=1 // pred_check_branch
      %80 = sbr.rel (0) target = $region29
    $region28: #{tpu_custom_call.1} parent=1 // pred_region
      %81 = dma.done [#allocation4], 128
    $region29: #{tpu_custom_call.1} parent=1 // pred_fallthru
      _
    %82 = vsyncpa [#allocation3], 1
    %83 = vsyncpa [#allocation6], 1
    %84 = vsyncpa [#allocation4], 1

</llo_original>
